<compile_context>
chip_gen: v7x
topology: tpu7x:2x2x1
jax: 0.10.0
libtpu: 0.0.40
codegen_flags: <defaults>
</compile_context>

<pallas_src>
import jax
import jax.numpy as jnp
from jax.experimental import pallas as pl
from jax.experimental.pallas import tpu as pltpu


def _leaky_relu(v):
    # F.leaky_relu default negative_slope = 0.01
    return jnp.where(v > 0, v, 0.01 * v)


def resblock1x1_kernel(x_ref, w1_ref, b1_ref, w2_ref, b2_ref, o_ref):
    # x_ref: (1, C, L)   activation tile, channels on sublanes, spatial on lanes
    # w1/w2: (C, C)      1x1 conv weights as (Cout, Cin) matrices
    # b1/b2: (C, 1)      biases (broadcast over the lane/spatial axis)
    # o_ref: (1, C, L)
    x = x_ref[0]                                                     # (C, L) f32

    # conv1 (1x1) + bias + leaky_relu : h = leaky(W1 @ x + b1)
    h = jnp.dot(w1_ref[...], x, preferred_element_type=jnp.float32) + b1_ref[...]
    h = _leaky_relu(h)

    # conv2 (1x1) + bias + residual + leaky_relu : y = leaky(W2 @ h + b2 + x)
    y = jnp.dot(w2_ref[...], h, preferred_element_type=jnp.float32) + b2_ref[...] + x
    y = _leaky_relu(y)

    o_ref[0] = y.astype(o_ref.dtype)


def _pick_spatial_tile(hw, c, max_lane=16384):
    """Largest multiple-of-128 divisor of hw (capped), else full hw."""
    if hw % 128 != 0:
        return hw
    tl = 128
    while tl * 2 <= min(hw, max_lane) and hw % (tl * 2) == 0:
        tl *= 2
    return tl


def res_block_1x1(x_nchw, w1_oihw, b1, w2_oihw, b2):
    """Forward of ResBlock1x1. x: (B, C, H, W); w*: (C, C, 1, 1); b*: (C,)."""
    B, C, H, W = x_nchw.shape
    HW = H * W

    x = x_nchw.reshape(B, C, HW)            # contiguous reshape, no HBM transpose
    w1 = w1_oihw.reshape(C, C)              # (Cout, Cin, 1, 1) -> (Cout, Cin)
    w2 = w2_oihw.reshape(C, C)
    b1c = b1.reshape(C, 1)
    b2c = b2.reshape(C, 1)

    tl = _pick_spatial_tile(HW, C)
    grid = (B, HW // tl)

    # VMEM budget: double-buffered x tile + double-buffered out tile + live
    # intermediate (C, tl) + weights/biases, with generous headroom.
    tile_bytes = C * tl * 4
    est = 5 * tile_bytes + (2 * C * C + 2 * C) * 4
    vmem_limit = min(max(4 * est, 1 << 20), 128 << 20)

    out = pl.pallas_call(
        resblock1x1_kernel,
        out_shape=jax.ShapeDtypeStruct((B, C, HW), x.dtype),
        grid=grid,
        in_specs=[
            pl.BlockSpec((1, C, tl), lambda b, s: (b, 0, s)),
            pl.BlockSpec((C, C), lambda b, s: (0, 0)),
            pl.BlockSpec((C, 1), lambda b, s: (0, 0)),
            pl.BlockSpec((C, C), lambda b, s: (0, 0)),
            pl.BlockSpec((C, 1), lambda b, s: (0, 0)),
        ],
        out_specs=pl.BlockSpec((1, C, tl), lambda b, s: (b, 0, s)),
        compiler_params=pltpu.CompilerParams(
            dimension_semantics=("parallel", "parallel"),
            vmem_limit_bytes=int(vmem_limit)),
    )(x, w1, b1c, w2, b2c)

    return out.reshape(B, C, H, W)


def _reference(x, w1, b1, w2, b2):
    C = x.shape[1]

    def conv1x1(inp, w, b):
        y = jnp.einsum('bchw,oc->bohw', inp, w.reshape(C, C))
        return y + b[None, :, None, None]

    h = _leaky_relu(conv1x1(x, w1, b1))
    y = conv1x1(h, w2, b2) + x
    return _leaky_relu(y)


if __name__ == "__main__":
    key = jax.random.PRNGKey(0)
    k_x, k_w1, k_b1, k_w2, k_b2 = jax.random.split(key, 5)

    B, C, H, W = 2, 4, 16, 16

    x = jax.random.normal(k_x, (B, C, H, W), dtype=jnp.float32)

    # Deterministic param init (shapes from nn.Conv2d(C, C, 1, 1, 0, bias=True)).
    fan_in = C * 1 * 1
    bound = 1.0 / jnp.sqrt(jnp.float32(fan_in))
    w1 = jax.random.uniform(k_w1, (C, C, 1, 1), jnp.float32, -bound, bound)
    b1 = jax.random.uniform(k_b1, (C,), jnp.float32, -bound, bound)
    w2 = jax.random.uniform(k_w2, (C, C, 1, 1), jnp.float32, -bound, bound)
    b2 = jax.random.uniform(k_b2, (C,), jnp.float32, -bound, bound)

    out = res_block_1x1(x, w1, b1, w2, b2)
    out = jax.block_until_ready(out)

    ref = _reference(x, w1, b1, w2, b2)
    assert out.shape == (B, C, H, W)
    assert jnp.max(jnp.abs(out - ref)) < 1e-4

    print("KERNEL_OK")
</pallas_src>

<mosaic_0001>
module attributes {stable_mosaic.version = 11 : i64} {
  func.func @resblock1x1_kernel(%arg0: i32, %arg1: i32, %arg2: memref<1x4x256xf32, #tpu.memory_space<vmem>>, %arg3: memref<4x4xf32, #tpu.memory_space<vmem>>, %arg4: memref<4x1xf32, #tpu.memory_space<vmem>>, %arg5: memref<4x4xf32, #tpu.memory_space<vmem>>, %arg6: memref<4x1xf32, #tpu.memory_space<vmem>>, %arg7: memref<1x4x256xf32, #tpu.memory_space<vmem>>) attributes {dimension_semantics = [#tpu.dimension_semantics<parallel>, #tpu.dimension_semantics<parallel>], iteration_bounds = array<i64: 2, 1>, scalar_prefetch = 0 : i64, scratch_operands = 0 : i64, tpu.core_type = #tpu.core_type<tc>, window_params = [{transform_indices = @transform_0, window_bounds = array<i64: 1, 4, 256>}, {pipeline_mode = #tpu.pipeline_mode<synchronous>, transform_indices = @transform_1, window_bounds = array<i64: 4, 4>}, {pipeline_mode = #tpu.pipeline_mode<synchronous>, transform_indices = @transform_2, window_bounds = array<i64: 4, 1>}, {pipeline_mode = #tpu.pipeline_mode<synchronous>, transform_indices = @transform_3, window_bounds = array<i64: 4, 4>}, {pipeline_mode = #tpu.pipeline_mode<synchronous>, transform_indices = @transform_4, window_bounds = array<i64: 4, 1>}, {transform_indices = @transform_5, window_bounds = array<i64: 1, 4, 256>}]} {
    %c0 = arith.constant 0 : index
    %c0_0 = arith.constant 0 : index
    %c0_1 = arith.constant 0 : index
    %0 = vector.load %arg2[%c0, %c0_0, %c0_1] : memref<1x4x256xf32, #tpu.memory_space<vmem>>, vector<1x4x256xf32>
    %1 = vector.shape_cast %0 : vector<1x4x256xf32> to vector<4x256xf32>
    %c0_2 = arith.constant 0 : index
    %c0_3 = arith.constant 0 : index
    %2 = vector.load %arg3[%c0_2, %c0_3] : memref<4x4xf32, #tpu.memory_space<vmem>>, vector<4x4xf32>
    %cst = arith.constant dense<0.000000e+00> : vector<4x256xf32>
    %3 = tpu.matmul %2, %1, %cst {dimension_numbers = #tpu.dot_dimension_numbers<[1], [0], [0], [1], [0, 0, 1, 1], [], []>} : vector<4x4xf32>, vector<4x256xf32>, vector<4x256xf32> -> vector<4x256xf32>
    %c0_4 = arith.constant 0 : index
    %c0_5 = arith.constant 0 : index
    %4 = vector.load %arg4[%c0_4, %c0_5] : memref<4x1xf32, #tpu.memory_space<vmem>>, vector<4x1xf32>
    %5 = vector.broadcast %4 : vector<4x1xf32> to vector<4x256xf32>
    %6 = arith.addf %3, %5 : vector<4x256xf32>
    %cst_6 = arith.constant 0.000000e+00 : f32
    %7 = vector.broadcast %cst_6 : f32 to vector<4x256xf32>
    %8 = arith.cmpf ogt, %6, %7 : vector<4x256xf32>
    %cst_7 = arith.constant 0.00999999977 : f32
    %9 = vector.broadcast %cst_7 : f32 to vector<4x256xf32>
    %10 = arith.mulf %9, %6 : vector<4x256xf32>
    %11 = arith.select %8, %6, %10 : vector<4x256xi1>, vector<4x256xf32>
    %c0_8 = arith.constant 0 : index
    %c0_9 = arith.constant 0 : index
    %12 = vector.load %arg5[%c0_8, %c0_9] : memref<4x4xf32, #tpu.memory_space<vmem>>, vector<4x4xf32>
    %cst_10 = arith.constant dense<0.000000e+00> : vector<4x256xf32>
    %13 = tpu.matmul %12, %11, %cst_10 {dimension_numbers = #tpu.dot_dimension_numbers<[1], [0], [0], [1], [0, 0, 1, 1], [], []>} : vector<4x4xf32>, vector<4x256xf32>, vector<4x256xf32> -> vector<4x256xf32>
    %c0_11 = arith.constant 0 : index
    %c0_12 = arith.constant 0 : index
    %14 = vector.load %arg6[%c0_11, %c0_12] : memref<4x1xf32, #tpu.memory_space<vmem>>, vector<4x1xf32>
    %15 = vector.broadcast %14 : vector<4x1xf32> to vector<4x256xf32>
    %16 = arith.addf %13, %15 : vector<4x256xf32>
    %17 = arith.addf %16, %1 : vector<4x256xf32>
    %cst_13 = arith.constant 0.000000e+00 : f32
    %18 = vector.broadcast %cst_13 : f32 to vector<4x256xf32>
    %19 = arith.cmpf ogt, %17, %18 : vector<4x256xf32>
    %cst_14 = arith.constant 0.00999999977 : f32
    %20 = vector.broadcast %cst_14 : f32 to vector<4x256xf32>
    %21 = arith.mulf %20, %17 : vector<4x256xf32>
    %22 = arith.select %19, %17, %21 : vector<4x256xi1>, vector<4x256xf32>
    %c0_15 = arith.constant 0 : index
    %c0_16 = arith.constant 0 : index
    %c0_17 = arith.constant 0 : index
    %23 = vector.load %arg7[%c0_15, %c0_16, %c0_17] : memref<1x4x256xf32, #tpu.memory_space<vmem>>, vector<1x4x256xf32>
    %24 = vector.shape_cast %23 : vector<1x4x256xf32> to vector<4x256xf32>
    %25 = vector.shape_cast %22 : vector<4x256xf32> to vector<1x4x256xf32>
    tpu.vector_store %arg7[%c0_15, %c0_16, %c0_17], %25 {strides = array<i32>} : memref<1x4x256xf32, #tpu.memory_space<vmem>>, vector<1x4x256xf32>,
    return
  }
  func.func @transform_0(%arg0: i32, %arg1: i32) -> (i32, i32, i32) {
    %c0_i32 = arith.constant 0 : i32
    %c0_i32_0 = arith.constant 0 : i32
    return %arg0, %c0_i32, %arg1 : i32, i32, i32
  }
  func.func @transform_1(%arg0: i32, %arg1: i32) -> (i32, i32) {
    %c0_i32 = arith.constant 0 : i32
    %c0_i32_0 = arith.constant 0 : i32
    %c0_i32_1 = arith.constant 0 : i32
    return %c0_i32, %c0_i32_0 : i32, i32
  }
  func.func @transform_2(%arg0: i32, %arg1: i32) -> (i32, i32) {
    %c0_i32 = arith.constant 0 : i32
    %c0_i32_0 = arith.constant 0 : i32
    %c0_i32_1 = arith.constant 0 : i32
    return %c0_i32, %c0_i32_0 : i32, i32
  }
  func.func @transform_3(%arg0: i32, %arg1: i32) -> (i32, i32) {
    %c0_i32 = arith.constant 0 : i32
    %c0_i32_0 = arith.constant 0 : i32
    %c0_i32_1 = arith.constant 0 : i32
    return %c0_i32, %c0_i32_0 : i32, i32
  }
  func.func @transform_4(%arg0: i32, %arg1: i32) -> (i32, i32) {
    %c0_i32 = arith.constant 0 : i32
    %c0_i32_0 = arith.constant 0 : i32
    %c0_i32_1 = arith.constant 0 : i32
    return %c0_i32, %c0_i32_0 : i32, i32
  }
  func.func @transform_5(%arg0: i32, %arg1: i32) -> (i32, i32, i32) {
    %c0_i32 = arith.constant 0 : i32
    %c0_i32_0 = arith.constant 0 : i32
    return %arg0, %c0_i32, %arg1 : i32, i32, i32
  }
}

</mosaic_0001>

<llo_original>
// kernel: tpu_custom_call.1
$region0: #{tpu_custom_call.1}
  #allocation0 [shape = 'u32[]', space=smem, size = 0x4, offset = 0x4, fixed_abs, tag = 'smem constant byte address 0x4 - core index']
  #allocation1 [shape = 'u32[144,128]{1,0:T(1,128)}', space=vmem, size = 0x12000, scoped, tag = 'internal scratch']
  %s0 = inlined_call_operand.hbm [shape: f32[2,4,256], index: 0, kind: input, shape index: {}]
  %s1 = inlined_call_operand.vmem [shape: f32[4,4], index: 1, kind: input, shape index: {}]
  %s2 = inlined_call_operand.vmem [shape: f32[4,1], index: 2, kind: input, shape index: {}]
  %s3 = inlined_call_operand.vmem [shape: f32[4,4], index: 3, kind: input, shape index: {}]
  %s4 = inlined_call_operand.vmem [shape: f32[4,1], index: 4, kind: input, shape index: {}]
  %s5 = inlined_call_operand.hbm [shape: f32[2,4,256], index: 5, kind: output, shape index: {}]
  %s6 = sld [smem:[#allocation0]]
  $region57: #{tpu_custom_call.1} parent=0
    _
  %s8 = ssub.s32 1, %s6
  %s9 = scalar_select 0, %s8, %s6
  $region1: #{tpu_custom_call.1} parent=0
    #allocation2 [shape = 'u8[8192]{0}', space=vmem, size = 0x2000, scoped, tag = 'input window, operand 0']
    #allocation3 [shape = 's32[2]{0}', space=sflag, size = 0x8, scoped, tag = 'scoped memory for tpu_custom_call.1']
    #allocation4 [shape = 's32[2]{0}', space=sflag, size = 0x8, scoped, tag = 'scoped memory for tpu_custom_call.1']
    #allocation5 [shape = 'u8[8192]{0}', space=vmem, size = 0x2000, scoped, tag = 'output window, operand 0']
    %10 = vsyncpa [#allocation3], 0
    %s11 = scalar_lea.sflag [#allocation3], 1
    %12 = vsyncpa %s11, 0
    %13 = vsyncpa [#allocation4], 0
    %s14 = scalar_lea.sflag [#allocation4], 1
    %15 = vsyncpa %s14, 0
    loop: start=0, step=1, limit=4
    $region2: #{tpu_custom_call.1} parent=1 // loop_pre_header
      _
    $region3: #{tpu_custom_call.1} parent=1 // loop_header
      %s17 = sphi 0, %s21
      %p18 = scmp.ge.s32.totalorder %s17, 4
      %s24 = sphi 0, %s36
      %s25 = sphi 0, %s32
      %s26 = sphi 0, %s24
      %s27 = sphi 0, %s25
      %s28 = sphi 0, %s26
      %s29 = sphi 0, %s27
      %s41 = sphi 0, %s43
      %s44 = sphi 0, %s41
      %s45 = sphi 0, %s44
      %s61 = sphi 0, %s45
      %s65 = sphi 0, %s65
      %s67 = sphi 0, %s65
      %s68 = sphi 0, %s67
      %s82 = sphi 0, %s68
      %s86 = sphi 0, %s86
      %s88 = sphi 0, %s86
      %s89 = sphi 0, %s88
      %s103 = sphi 0, %s89
      %s107 = sphi 0, %s107
      %s109 = sphi 0, %s107
      %s110 = sphi 0, %s109
      %s124 = sphi 0, %s110
      %s128 = sphi 0, %s128
      %s130 = sphi 0, %s128
      %s131 = sphi 0, %s130
      %s145 = sphi 0, %s131
      %s153 = sphi 0, %s155
      %s156 = sphi 0, %s153
      %s157 = sphi 0, %s156
      %s173 = sphi 0, %s157
    $region4: #{tpu_custom_call.1} parent=1 // loop_header_branch
      %20 = sbr.rel (%p18) target = $region8
    $region5: #{tpu_custom_call.1} parent=1 // loop_body
      %s22 = ssub.s32 %s17, 1
      %s23 = ssub.s32 %s17, 2
      %s30 = sadd.s32 1, %s25
      %p31 = scmp.ge.s32.totalorder %s30, 1
      %s32 = scalar_select %p31, 0, %s30
      %s33 = sadd.s32 1, %s24
      %s34 = scalar_select %p31, %s33, %s24
      %p35 = scmp.ge.s32.totalorder %s34, 2
      %s36 = scalar_select %p35, 0, %s34
      %s37 = ssub.s32 %s24, %s36
      %s38 = ssub.s32 %s25, %s32
      %s39 = sor.u32 %s37, %s38
      %p40 = scmp.eq.s32.totalorder %s39, 0
      %s42 = sadd.s32 %s41, 1
      %s43 = scalar_select %p40, %s41, %s42
      %p46 = pneg %p40
      %p47 = scmp.eq.s32.totalorder %s17, 1
      %p48 = por %p46, %p47
      %p49 = scmp.ne.s32.totalorder %s41, %s44
      %p50 = scmp.eq.s32.totalorder %s17, 0
      %p51 = por %p49, %p50
      %p52 = scmp.ne.s32.totalorder %s41, %s44
      %p53 = scmp.eq.s32.totalorder %s22, 1
      %p54 = por %p52, %p53
      %p55 = scmp.ne.s32.totalorder %s44, %s45
      %p56 = scmp.eq.s32.totalorder %s22, 0
      %p57 = por %p55, %p56
      %p58 = scmp.ne.s32.totalorder %s44, %s45
      %p59 = scmp.eq.s32.totalorder %s23, 1
      %p60 = por %p58, %p59
      %p62 = scmp.ne.s32.totalorder %s45, %s61
      %p63 = scmp.eq.s32.totalorder %s23, 0
      %p64 = por %p62, %p63
      %s66 = sadd.s32 %s65, 1
      %p69 = scmp.eq.s32.totalorder %s17, 1
      %p70 = scmp.ne.s32.totalorder %s65, %s67
      %p71 = scmp.eq.s32.totalorder %s17, 0
      %p72 = por %p70, %p71
      %p73 = scmp.ne.s32.totalorder %s65, %s67
      %p74 = scmp.eq.s32.totalorder %s22, 1
      %p75 = por %p73, %p74
      %p76 = scmp.ne.s32.totalorder %s67, %s68
      %p77 = scmp.eq.s32.totalorder %s22, 0
      %p78 = por %p76, %p77
      %p79 = scmp.ne.s32.totalorder %s67, %s68
      %p80 = scmp.eq.s32.totalorder %s23, 1
      %p81 = por %p79, %p80
      %p83 = scmp.ne.s32.totalorder %s68, %s82
      %p84 = scmp.eq.s32.totalorder %s23, 0
      %p85 = por %p83, %p84
      %s87 = sadd.s32 %s86, 1
      %p90 = scmp.eq.s32.totalorder %s17, 1
      %p91 = scmp.ne.s32.totalorder %s86, %s88
      %p92 = scmp.eq.s32.totalorder %s17, 0
      %p93 = por %p91, %p92
      %p94 = scmp.ne.s32.totalorder %s86, %s88
      %p95 = scmp.eq.s32.totalorder %s22, 1
      %p96 = por %p94, %p95
      %p97 = scmp.ne.s32.totalorder %s88, %s89
      %p98 = scmp.eq.s32.totalorder %s22, 0
      %p99 = por %p97, %p98
      %p100 = scmp.ne.s32.totalorder %s88, %s89
      %p101 = scmp.eq.s32.totalorder %s23, 1
      %p102 = por %p100, %p101
      %p104 = scmp.ne.s32.totalorder %s89, %s103
      %p105 = scmp.eq.s32.totalorder %s23, 0
      %p106 = por %p104, %p105
      %s108 = sadd.s32 %s107, 1
      %p111 = scmp.eq.s32.totalorder %s17, 1
      %p112 = scmp.ne.s32.totalorder %s107, %s109
      %p113 = scmp.eq.s32.totalorder %s17, 0
      %p114 = por %p112, %p113
      %p115 = scmp.ne.s32.totalorder %s107, %s109
      %p116 = scmp.eq.s32.totalorder %s22, 1
      %p117 = por %p115, %p116
      %p118 = scmp.ne.s32.totalorder %s109, %s110
      %p119 = scmp.eq.s32.totalorder %s22, 0
      %p120 = por %p118, %p119
      %p121 = scmp.ne.s32.totalorder %s109, %s110
      %p122 = scmp.eq.s32.totalorder %s23, 1
      %p123 = por %p121, %p122
      %p125 = scmp.ne.s32.totalorder %s110, %s124
      %p126 = scmp.eq.s32.totalorder %s23, 0
      %p127 = por %p125, %p126
      %s129 = sadd.s32 %s128, 1
      %p132 = scmp.eq.s32.totalorder %s17, 1
      %p133 = scmp.ne.s32.totalorder %s128, %s130
      %p134 = scmp.eq.s32.totalorder %s17, 0
      %p135 = por %p133, %p134
      %p136 = scmp.ne.s32.totalorder %s128, %s130
      %p137 = scmp.eq.s32.totalorder %s22, 1
      %p138 = por %p136, %p137
      %p139 = scmp.ne.s32.totalorder %s130, %s131
      %p140 = scmp.eq.s32.totalorder %s22, 0
      %p141 = por %p139, %p140
      %p142 = scmp.ne.s32.totalorder %s130, %s131
      %p143 = scmp.eq.s32.totalorder %s23, 1
      %p144 = por %p142, %p143
      %p146 = scmp.ne.s32.totalorder %s131, %s145
      %p147 = scmp.eq.s32.totalorder %s23, 0
      %p148 = por %p146, %p147
      %s149 = ssub.s32 %s24, %s36
      %s150 = ssub.s32 %s25, %s32
      %s151 = sor.u32 %s149, %s150
      %p152 = scmp.eq.s32.totalorder %s151, 0
      %s154 = sadd.s32 %s153, 1
      %s155 = scalar_select %p152, %s153, %s154
      %p158 = pneg %p152
      %p159 = scmp.eq.s32.totalorder %s17, 1
      %p160 = por %p158, %p159
      %p161 = scmp.ne.s32.totalorder %s153, %s156
      %p162 = scmp.eq.s32.totalorder %s17, 0
      %p163 = por %p161, %p162
      %p164 = scmp.ne.s32.totalorder %s153, %s156
      %p165 = scmp.eq.s32.totalorder %s22, 1
      %p166 = por %p164, %p165
      %p167 = scmp.ne.s32.totalorder %s156, %s157
      %p168 = scmp.eq.s32.totalorder %s22, 0
      %p169 = por %p167, %p168
      %p170 = scmp.ne.s32.totalorder %s156, %s157
      %p171 = scmp.eq.s32.totalorder %s23, 1
      %p172 = por %p170, %p171
      %p174 = scmp.ne.s32.totalorder %s157, %s173
      %p175 = scmp.eq.s32.totalorder %s23, 0
      %p176 = por %p174, %p175
      %p177 = scmp.le.s32.totalorder 1, %s17
      %p178 = scmp.lt.s32.totalorder %s17, 3
      %p179 = pnand %p177, %p178
      %p180 = pneg %p179
      // Predicated region
      $region9: #{tpu_custom_call.1} parent=5 // pred_check
        _
      $region10: #{tpu_custom_call.1} parent=5 // pred_check_branch
        %182 = sbr.rel (%p179) target = $region12
      $region11: #{tpu_custom_call.1} parent=5 // pred_region
        %s183 = ssub.s32 %s17, 1
        // Predicated region
        $region13: #{tpu_custom_call.1} parent=11 // pred_check
          %p184 = pneg %p78
        $region14: #{tpu_custom_call.1} parent=11 // pred_check_branch
          %186 = sbr.rel (%p184) target = $region16
        $region15: #{tpu_custom_call.1} parent=11 // pred_region
          _
        $region16: #{tpu_custom_call.1} parent=11 // pred_fallthru
          _
        // Predicated region
        $region17: #{tpu_custom_call.1} parent=11 // pred_check
          %p187 = pneg %p99
        $region18: #{tpu_custom_call.1} parent=11 // pred_check_branch
          %189 = sbr.rel (%p187) target = $region20
        $region19: #{tpu_custom_call.1} parent=11 // pred_region
          _
        $region20: #{tpu_custom_call.1} parent=11 // pred_fallthru
          _
        // Predicated region
        $region21: #{tpu_custom_call.1} parent=11 // pred_check
          %p190 = pneg %p120
        $region22: #{tpu_custom_call.1} parent=11 // pred_check_branch
          %192 = sbr.rel (%p190) target = $region24
        $region23: #{tpu_custom_call.1} parent=11 // pred_region
          _
        $region24: #{tpu_custom_call.1} parent=11 // pred_fallthru
          _
        // Predicated region
        $region25: #{tpu_custom_call.1} parent=11 // pred_check
          %p193 = pneg %p141
        $region26: #{tpu_custom_call.1} parent=11 // pred_check_branch
          %195 = sbr.rel (%p193) target = $region28
        $region27: #{tpu_custom_call.1} parent=11 // pred_region
          _
        $region28: #{tpu_custom_call.1} parent=11 // pred_fallthru
          _
      $region12: #{tpu_custom_call.1} parent=5 // pred_fallthru
        _
      %p196 = scmp.lt.s32.totalorder %s17, 2
      // Predicated region
      $region29: #{tpu_custom_call.1} parent=5 // pred_check
        %p197 = pneg %p196
      $region30: #{tpu_custom_call.1} parent=5 // pred_check_branch
        %199 = sbr.rel (%p197) target = $region32
      $region31: #{tpu_custom_call.1} parent=5 // pred_region
        // Predicated region
        $region33: #{tpu_custom_call.1} parent=31 // pred_check
          %p200 = pneg %p51
        $region34: #{tpu_custom_call.1} parent=31 // pred_check_branch
          %202 = sbr.rel (%p200) target = $region36
        $region35: #{tpu_custom_call.1} parent=31 // pred_region
          %s203 = sand.u32 %s41, 1
          %s204 = scalar_lea.sflag [#allocation3], %s203
          %s205 = sand.u32 %s41, 1
          %s206 = smul.addr %s205, 8
          %s207 = scalar_lea.vmem [#allocation2], %s206
          %s208 = smul.u32 2, %s25
          %s210 = ssub.s32 128, 128
          %211 = vsyncadd %s204, %s210
          %s212 = smul.addr %s24, 2
          %s213 = sadd.s32 %s208, %s212
          %s214 = smul.addr %s213, 64
          %s215 = scalar_lea.hbm %s0, %s214
          %s217 = sshll.u32 %s207, 4
          %s218 = int_to_ptr.vmem [resolvable:$true] %s217
          %220 = dma.hbm_to_vmem [thread:$0]  %s215, 128, %s218, %s204
        $region36: #{tpu_custom_call.1} parent=31 // pred_fallthru
          _
      $region32: #{tpu_custom_call.1} parent=5 // pred_fallthru
        _
      %p221 = scmp.le.s32.totalorder 1, %s17
      %p222 = scmp.lt.s32.totalorder %s17, 3
      %p223 = pnand %p221, %p222
      %p224 = pneg %p223
      // Predicated region
      $region37: #{tpu_custom_call.1} parent=5 // pred_check
        _
      $region38: #{tpu_custom_call.1} parent=5 // pred_check_branch
        %226 = sbr.rel (%p223) target = $region40
      $region39: #{tpu_custom_call.1} parent=5 // pred_region
        %s227 = ssub.s32 %s17, 1
        %s228 = sand.u32 %s44, 1
        %s229 = scalar_lea.sflag [#allocation3], %s228
        %s230 = sand.u32 %s44, 1
        %s231 = smul.addr %s230, 8
        %s232 = scalar_lea.vmem [#allocation2], %s231
        // Predicated region
        $region41: #{tpu_custom_call.1} parent=39 // pred_check
          %p233 = pneg %p57
        $region42: #{tpu_custom_call.1} parent=39 // pred_check_branch
          %235 = sbr.rel (%p233) target = $region44
        $region43: #{tpu_custom_call.1} parent=39 // pred_region
          %236 = dma.done %s229, 128
        $region44: #{tpu_custom_call.1} parent=39 // pred_fallthru
          _
        %s237 = sand.u32 %s44, 1
        %s238 = scalar_lea.sflag [#allocation3], %s237
        %s239 = sand.u32 %s44, 1
        %s240 = smul.addr %s239, 8
        %s241 = scalar_lea.vmem [#allocation2], %s240
        %p242 = pneg %p57
        %p243 = pneg %p54
        %p244 = pneg %p78
        %p245 = pneg %p75
        %p246 = pneg %p99
        %p247 = pneg %p96
        %p248 = pneg %p120
        %p249 = pneg %p117
        %p250 = pneg %p141
        %p251 = pneg %p138
        %p252 = pneg %p169
        %p253 = pneg %p166
        %s254 = sand.u32 %s156, 1
        %s255 = scalar_lea.sflag [#allocation4], %s254
        %s256 = sand.u32 %s156, 1
        %s257 = smul.addr %s256, 8
        %s258 = scalar_lea.vmem [#allocation5], %s257
        %s259 = smul.u32 2, %s27
        %s260 = smul.u32 2, %s27
        %v261 = vld [vmem:[%s232] sm:$0xff]
        %v262 = vld [vmem:[%s1] sm:$0xf]
        %v263 = vld [vmem:[%s2] sm:$0xf]
        %265 = vset.pattern.permute.xlu0 0
        %266 = vperm.xlu0 %265, %v263
        %v267 = vpop.permute.xlu0 %266
        %v270 = vcombine.high %v261, %v261
        %vm271 = vcmask 31744
        %v273 = vsel %vm271, %v262, 0
        %vm275 = vcmask 1043456
        %v276 = vsel %vm275, %v261, 0
        %v278 = vsel %vm275, %v270, 0
        %280 = vmatprep.subr.mxu0 %v278
        %281 = vmatpush1.msra.mxu0 %v276
        %282 = vmatprep.subr.mxu0 0.0
        %283 = vmatpush1.msra.mxu0 0.0
        %284 = vmatprep.subr.mxu0 0.0
        %285 = vmatpush1.msra.mxu0 0.0
        %286 = vmatprep.subr.mxu0 0.0
        %287 = vmatpush1.msra.mxu0 0.0
        %288 = vmatprep.subr.mxu0 0.0
        %289 = vmatpush1.msra.mxu0 0.0
        %290 = vmatprep.subr.mxu0 0.0
        %291 = vmatpush1.msra.mxu0 0.0
        %292 = vmatprep.subr.mxu0 0.0
        %293 = vmatpush1.msra.mxu0 0.0
        %294 = vmatprep.subr.mxu0 0.0
        %295 = vmatpush1.msra.mxu0 0.0
        %296 = vmatprep.subr.mxu0 0.0
        %297 = vmatpush1.msra.mxu0 0.0
        %298 = vmatprep.subr.mxu0 0.0
        %299 = vmatpush1.msra.mxu0 0.0
        %300 = vmatprep.subr.mxu0 0.0
        %301 = vmatpush1.msra.mxu0 0.0
        %302 = vmatprep.subr.mxu0 0.0
        %303 = vmatpush1.msra.mxu0 0.0
        %304 = vmatprep.subr.mxu0 0.0
        %305 = vmatpush1.msra.mxu0 0.0
        %306 = vmatprep.subr.mxu0 0.0
        %307 = vmatpush1.msra.mxu0 0.0
        %308 = vmatprep.subr.mxu0 0.0
        %309 = vmatpush1.msra.mxu0 0.0
        %310 = vmatprep.subr.mxu0 0.0
        %311 = vmatpush1.msra.mxu0 0.0
        %312 = vmatprep.subr.mxu0 0.0
        %313 = vmatpush1.msra.mxu0 0.0
        %314 = vmatprep.subr.mxu0 0.0
        %315 = vmatpush1.msra.mxu0 0.0
        %316 = vmatprep.subr.mxu0 0.0
        %317 = vmatpush1.msra.mxu0 0.0
        %318 = vmatprep.subr.mxu0 0.0
        %319 = vmatpush1.msra.mxu0 0.0
        %320 = vmatprep.subr.mxu0 0.0
        %321 = vmatpush1.msra.mxu0 0.0
        %322 = vmatprep.subr.mxu0 0.0
        %323 = vmatpush1.msra.mxu0 0.0
        %324 = vmatprep.subr.mxu0 0.0
        %325 = vmatpush1.msra.mxu0 0.0
        %326 = vmatprep.subr.mxu0 0.0
        %327 = vmatpush1.msra.mxu0 0.0
        %328 = vmatprep.subr.mxu0 0.0
        %329 = vmatpush1.msra.mxu0 0.0
        %330 = vmatprep.subr.mxu0 0.0
        %331 = vmatpush1.msra.mxu0 0.0
        %332 = vmatprep.subr.mxu0 0.0
        %333 = vmatpush1.msra.mxu0 0.0
        %334 = vmatprep.subr.mxu0 0.0
        %335 = vmatpush1.msra.mxu0 0.0
        %336 = vmatprep.subr.mxu0 0.0
        %337 = vmatpush1.msra.mxu0 0.0
        %338 = vmatprep.subr.mxu0 0.0
        %339 = vmatpush1.msra.mxu0 0.0
        %340 = vmatprep.subr.mxu0 0.0
        %341 = vmatpush1.msra.mxu0 0.0
        %342 = vmatprep.subr.mxu0 0.0
        %343 = vmatpush1.msra.mxu0 0.0
        %344 = vmatprep.mubr.f32.mxu0 0.0
        %345 = vmatmul.mubr.f32.gmra.mrb[0].mxu0 %v273
        %v346 = vpop.f32.mrb[0].mxu0
        %v347 = vadd.f32 %v267, %v346
        %v348 = vpop.f32.mrb[0].mxu0
        %v349 = vadd.f32 %v267, %v348
        %350 = vdwg.mxu0
        %vm351 = vcmp.gt.f32.partialorder %v347, 0.0
        %vm352 = vcmp.gt.f32.partialorder %v349, 0.0
        %v353 = vmul.f32 %v347, 0.01
        %v354 = vmul.f32 %v349, 0.01
        %v355 = vsel %vm351, %v347, %v353
        %v356 = vsel %vm352, %v349, %v354
        %v357 = vld [vmem:[%s3] sm:$0xf]
        %v358 = vld [vmem:[%s4] sm:$0xf]
        %360 = vset.pattern.permute.xlu0 0
        %361 = vperm.xlu0 %360, %v358
        %v362 = vpop.permute.xlu0 %361
        %v365 = vsel %vm271, %v357, 0
        %v368 = vsel %vm275, %v355, 0
        %v371 = vsel %vm275, %v356, 0
        %373 = vmatprep.subr.mxu0 %v371
        %374 = vmatpush1.msra.mxu0 %v368
        %375 = vmatprep.subr.mxu0 0.0
        %376 = vmatpush1.msra.mxu0 0.0
        %377 = vmatprep.subr.mxu0 0.0
        %378 = vmatpush1.msra.mxu0 0.0
        %379 = vmatprep.subr.mxu0 0.0
        %380 = vmatpush1.msra.mxu0 0.0
        %381 = vmatprep.subr.mxu0 0.0
        %382 = vmatpush1.msra.mxu0 0.0
        %383 = vmatprep.subr.mxu0 0.0
        %384 = vmatpush1.msra.mxu0 0.0
        %385 = vmatprep.subr.mxu0 0.0
        %386 = vmatpush1.msra.mxu0 0.0
        %387 = vmatprep.subr.mxu0 0.0
        %388 = vmatpush1.msra.mxu0 0.0
        %389 = vmatprep.subr.mxu0 0.0
        %390 = vmatpush1.msra.mxu0 0.0
        %391 = vmatprep.subr.mxu0 0.0
        %392 = vmatpush1.msra.mxu0 0.0
        %393 = vmatprep.subr.mxu0 0.0
        %394 = vmatpush1.msra.mxu0 0.0
        %395 = vmatprep.subr.mxu0 0.0
        %396 = vmatpush1.msra.mxu0 0.0
        %397 = vmatprep.subr.mxu0 0.0
        %398 = vmatpush1.msra.mxu0 0.0
        %399 = vmatprep.subr.mxu0 0.0
        %400 = vmatpush1.msra.mxu0 0.0
        %401 = vmatprep.subr.mxu0 0.0
        %402 = vmatpush1.msra.mxu0 0.0
        %403 = vmatprep.subr.mxu0 0.0
        %404 = vmatpush1.msra.mxu0 0.0
        %405 = vmatprep.subr.mxu0 0.0
        %406 = vmatpush1.msra.mxu0 0.0
        %407 = vmatprep.subr.mxu0 0.0
        %408 = vmatpush1.msra.mxu0 0.0
        %409 = vmatprep.subr.mxu0 0.0
        %410 = vmatpush1.msra.mxu0 0.0
        %411 = vmatprep.subr.mxu0 0.0
        %412 = vmatpush1.msra.mxu0 0.0
        %413 = vmatprep.subr.mxu0 0.0
        %414 = vmatpush1.msra.mxu0 0.0
        %415 = vmatprep.subr.mxu0 0.0
        %416 = vmatpush1.msra.mxu0 0.0
        %417 = vmatprep.subr.mxu0 0.0
        %418 = vmatpush1.msra.mxu0 0.0
        %419 = vmatprep.subr.mxu0 0.0
        %420 = vmatpush1.msra.mxu0 0.0
        %421 = vmatprep.subr.mxu0 0.0
        %422 = vmatpush1.msra.mxu0 0.0
        %423 = vmatprep.subr.mxu0 0.0
        %424 = vmatpush1.msra.mxu0 0.0
        %425 = vmatprep.subr.mxu0 0.0
        %426 = vmatpush1.msra.mxu0 0.0
        %427 = vmatprep.subr.mxu0 0.0
        %428 = vmatpush1.msra.mxu0 0.0
        %429 = vmatprep.subr.mxu0 0.0
        %430 = vmatpush1.msra.mxu0 0.0
        %431 = vmatprep.subr.mxu0 0.0
        %432 = vmatpush1.msra.mxu0 0.0
        %433 = vmatprep.subr.mxu0 0.0
        %434 = vmatpush1.msra.mxu0 0.0
        %435 = vmatprep.subr.mxu0 0.0
        %436 = vmatpush1.msra.mxu0 0.0
        %437 = vmatprep.mubr.f32.mxu0 0.0
        %438 = vmatmul.mubr.f32.gmra.mrb[0].mxu0 %v365
        %v439 = vpop.f32.mrb[0].mxu0
        %v440 = vadd.f32 %v362, %v439
        %v441 = vpop.f32.mrb[0].mxu0
        %v442 = vadd.f32 %v362, %v441
        %443 = vdwg.mxu0
        %v445 = vadd.f32 %v440, %v261
        %v446 = vadd.f32 %v442, %v270
        %vm447 = vcmp.gt.f32.partialorder %v445, 0.0
        %vm448 = vcmp.gt.f32.partialorder %v446, 0.0
        %v449 = vmul.f32 %v445, 0.01
        %v450 = vmul.f32 %v446, 0.01
        %v451 = vsel %vm447, %v445, %v449
        %v452 = vsel %vm448, %v446, %v450
        %v455 = vcombine.low %v451, %v452
        %457 = vst [vmem:[%s258] sm:$0xff] %v455
        %s458 = sand.u32 %s156, 1
        %s459 = scalar_lea.sflag [#allocation4], %s458
        %s460 = sand.u32 %s156, 1
        %s461 = smul.addr %s460, 8
        %s462 = scalar_lea.vmem [#allocation5], %s461
        // Predicated region
        $region45: #{tpu_custom_call.1} parent=39 // pred_check
          %p463 = pneg %p166
        $region46: #{tpu_custom_call.1} parent=39 // pred_check_branch
          %465 = sbr.rel (%p463) target = $region48
        $region47: #{tpu_custom_call.1} parent=39 // pred_region
          %s466 = smul.u32 2, %s27
          %s468 = ssub.s32 128, 128
          %469 = vsyncadd %s459, %s468
          %s470 = smul.addr %s26, 2
          %s471 = sadd.s32 %s466, %s470
          %s472 = smul.addr %s471, 64
          %s473 = scalar_lea.hbm %s5, %s472
          %s475 = sshll.u32 %s462, 4
          %s476 = int_to_ptr.vmem [resolvable:$true] %s475
          %478 = dma.vmem_to_hbm [thread:$0]  %s476, 128, %s473, %s459
        $region48: #{tpu_custom_call.1} parent=39 // pred_fallthru
          _
      $region40: #{tpu_custom_call.1} parent=5 // pred_fallthru
        _
      %p479 = scmp.le.s32.totalorder 2, %s17
      // Predicated region
      $region49: #{tpu_custom_call.1} parent=5 // pred_check
        %p480 = pneg %p479
      $region50: #{tpu_custom_call.1} parent=5 // pred_check_branch
        %482 = sbr.rel (%p480) target = $region52
      $region51: #{tpu_custom_call.1} parent=5 // pred_region
        %s483 = ssub.s32 %s17, 2
        // Predicated region
        $region53: #{tpu_custom_call.1} parent=51 // pred_check
          %p484 = pneg %p172
        $region54: #{tpu_custom_call.1} parent=51 // pred_check_branch
          %486 = sbr.rel (%p484) target = $region56
        $region55: #{tpu_custom_call.1} parent=51 // pred_region
          %s487 = sand.u32 %s157, 1
          %s488 = scalar_lea.sflag [#allocation4], %s487
          %s489 = sand.u32 %s157, 1
          %s490 = smul.addr %s489, 8
          %s491 = scalar_lea.vmem [#allocation5], %s490
          %492 = dma.done %s488, 128
        $region56: #{tpu_custom_call.1} parent=51 // pred_fallthru
          _
      $region52: #{tpu_custom_call.1} parent=5 // pred_fallthru
        _
    $region6: #{tpu_custom_call.1} parent=1 // loop_footer
      %s21 = sadd.s32 1, %s17
    $region7: #{tpu_custom_call.1} parent=1 // loop_footer_branch
      %16 = sbr.rel target = $region3
    $region8: #{tpu_custom_call.1} parent=1 // loop_exit
      _
    %493 = vsyncpa [#allocation3], 1
    %s494 = scalar_lea.sflag [#allocation3], 1
    %495 = vsyncpa %s494, 1
    %496 = vsyncpa [#allocation4], 1
    %s497 = scalar_lea.sflag [#allocation4], 1
    %498 = vsyncpa %s497, 1

</llo_original>
